<compile_context>
chip_gen: v7x
topology: tpu7x:2x2x1
jax: 0.10.0
libtpu: 0.0.40
codegen_flags: <defaults>
</compile_context>

<pallas_src>
import jax
import jax.numpy as jnp
from jax.experimental import pallas as pl
from jax.experimental.pallas import tpu as pltpu


def dqn_kernel(x_ref, w1_ref, b1_ref, w2_ref, b2_ref, slab_ref, colsum_ref):
    # Fused layer 1: one MXU pass for both value and advantage streams.
    x = x_ref[...]                                                        # (TB, F)  bf16/f32
    h = jnp.dot(x, w1_ref[...], preferred_element_type=jnp.float32)      # (TB, 2L) f32
    h = jnp.maximum(h + b1_ref[...], 0.0)                                # bias + ReLU in f32

    # Fused layer 2: one lane-dense MXU pass producing [v+adv_0 .. v+adv_{A-1} | v | 0 ...].
    h = h.astype(w2_ref.dtype)
    out2 = jnp.dot(h, w2_ref[...], preferred_element_type=jnp.float32)   # (TB, 128) f32
    out2 = out2 + b2_ref[...]

    # Lane-dense store of the pre-mean slab.
    slab_ref[...] = out2.astype(slab_ref.dtype)

    # Per-block column sums (sublane/XLU reduction) so the wrapper can form the
    # global mean over all batch blocks without a cross-block accumulator.
    s = jnp.sum(out2, axis=0, keepdims=True)                             # (1, 128)
    colsum_ref[0] = jnp.broadcast_to(s, (8, out2.shape[-1])).astype(colsum_ref.dtype)


def pack_params(params, matmul_dtype):
    """Pack the two streams into one (F,2L) layer-1 and one (2L, 128) layer-2 weight."""
    (w1v, b1v, w2v, b2v, w1a, b1a, w2a, b2a) = params
    F, L = w1v.shape
    A = w2a.shape[1]
    out_pad = max(128, ((A + 1 + 127) // 128) * 128)   # lane-dense output width

    w1 = jnp.concatenate([w1v, w1a], axis=1).astype(matmul_dtype)        # (F, 2L)
    b1 = jnp.concatenate([b1v, b1a], axis=1).astype(jnp.float32)         # (1, 2L)

    # Column j < A: [w2v ; w2a[:, j]]  -> produces v + adv_j directly (no lane broadcast needed).
    # Column A    : [w2v ; 0]          -> produces v (needed to recover sum(adv) for the mean).
    w2 = jnp.zeros((2 * L, out_pad), jnp.float32)
    w2 = w2.at[:L, :A].set(jnp.broadcast_to(w2v, (L, A)))
    w2 = w2.at[L:, :A].set(w2a)
    w2 = w2.at[:L, A].set(w2v[:, 0])
    w2 = w2.astype(matmul_dtype)

    b2 = jnp.zeros((1, out_pad), jnp.float32)
    b2 = b2.at[0, :A].set(b2v[0, 0] + b2a[0, :])                         # fold b2v into packed bias
    b2 = b2.at[0, A].set(b2v[0, 0])
    return w1, b1, w2, b2, A, out_pad


def dqn_forward(x, params, *, matmul_dtype=jnp.bfloat16, block_batch=256):
    B, F = x.shape
    w1, b1, w2, b2, A, out_pad = pack_params(params, matmul_dtype)
    L2 = w1.shape[1]

    TB = B if B <= block_batch else block_batch
    assert B % TB == 0  # TODO(synk): pad/mask a ragged final batch block for arbitrary B
    NB = B // TB

    x_mm = x.astype(matmul_dtype)   # halves x HBM traffic on the bf16 path

    slab, colsum = pl.pallas_call(
        dqn_kernel,
        out_shape=(
            jax.ShapeDtypeStruct((B, out_pad), jnp.float32),       # lane-dense [v+adv | v | pad]
            jax.ShapeDtypeStruct((NB, 8, out_pad), jnp.float32),   # per-block column sums
        ),
        grid_spec=pltpu.PrefetchScalarGridSpec(
            num_scalar_prefetch=0,
            grid=(NB,),
            in_specs=[
                pl.BlockSpec((TB, F), lambda i: (i, 0)),           # x: streamed per batch block
                pl.BlockSpec((F, L2), lambda i: (0, 0)),           # weights: VMEM-resident
                pl.BlockSpec((1, L2), lambda i: (0, 0)),
                pl.BlockSpec((L2, out_pad), lambda i: (0, 0)),
                pl.BlockSpec((1, out_pad), lambda i: (0, 0)),
            ],
            out_specs=(
                pl.BlockSpec((TB, out_pad), lambda i: (i, 0)),
                pl.BlockSpec((1, 8, out_pad), lambda i: (i, 0, 0)),
            ),
        ),
        compiler_params=pltpu.CompilerParams(
            dimension_semantics=("parallel",),       # batch blocks are independent -> megacore OK
            vmem_limit_bytes=32 * 1024 * 1024,       # sized for v7x's smaller (64 MiB) VMEM too
        ),
    )(x_mm, w1, b1, w2, b2)

    # Global-mean epilogue. mean(adv) couples all batch blocks, so it is finished here
    # from the per-block partial sums (never a per-block mean).
    totals = jnp.sum(colsum[:, 0, :], axis=0)                    # (out_pad,)
    sum_adv = jnp.sum(totals[:A]) - A * totals[A]                # sum(v+adv) - A*sum(v)
    mean_adv = sum_adv / (B * A)
    return slab[:, :A] - mean_adv


def init_params(key, n_features, n_actions, layer_size=64):
    """Deterministic synthetic weights; stored as (in, out) + (1, out) biases."""
    ks = jax.random.split(key, 8)
    scale = 0.1
    w1v = scale * jax.random.normal(ks[0], (n_features, layer_size), jnp.float32)
    b1v = scale * jax.random.normal(ks[1], (1, layer_size), jnp.float32)
    w2v = scale * jax.random.normal(ks[2], (layer_size, 1), jnp.float32)
    b2v = scale * jax.random.normal(ks[3], (1, 1), jnp.float32)
    w1a = scale * jax.random.normal(ks[4], (n_features, layer_size), jnp.float32)
    b1a = scale * jax.random.normal(ks[5], (1, layer_size), jnp.float32)
    w2a = scale * jax.random.normal(ks[6], (layer_size, n_actions), jnp.float32)
    b2a = scale * jax.random.normal(ks[7], (1, n_actions), jnp.float32)
    return (w1v, b1v, w2v, b2v, w1a, b1a, w2a, b2a)


def dqn_reference(x, params):
    """Pure-JAX reference mirroring the PyTorch forward."""
    (w1v, b1v, w2v, b2v, w1a, b1a, w2a, b2a) = params
    h_v = jnp.maximum(x @ w1v + b1v, 0.0)
    v = h_v @ w2v + b2v
    h_a = jnp.maximum(x @ w1a + b1a, 0.0)
    adv = h_a @ w2a + b2a
    return v + (adv - adv.mean())


if __name__ == "__main__":
    # Small shapes consistent with a 1-D state DQN: state_shape=(32,), n_actions=8, layer_size=64.
    B, F, A, L = 8, 32, 8, 64

    key = jax.random.PRNGKey(0)
    k_x, k_p = jax.random.split(key)
    x = jax.random.normal(k_x, (B, F), jnp.float32)
    params = init_params(k_p, F, A, L)

    ref = dqn_reference(x, params)

    # f32 matmul path: strict check against the PyTorch-faithful reference.
    out_f32 = jax.block_until_ready(dqn_forward(x, params, matmul_dtype=jnp.float32))
    assert out_f32.shape == (B, A)
    assert jnp.allclose(out_f32, ref, atol=1e-4, rtol=1e-4), "f32 kernel mismatch vs reference"

    # bf16 matmul-operand path (v5e/v6e/v7x fast MXU path): loose check.
    out_bf16 = jax.block_until_ready(dqn_forward(x, params, matmul_dtype=jnp.bfloat16))
    assert out_bf16.shape == (B, A)
    assert jnp.max(jnp.abs(out_bf16 - ref)) < 5e-2, "bf16 kernel mismatch vs reference"

    print("KERNEL_OK")
</pallas_src>

<mosaic_0001>
module attributes {stable_mosaic.version = 11 : i64} {
  func.func @dqn_kernel(%arg0: i32, %arg1: memref<8x32xf32, #tpu.memory_space<vmem>>, %arg2: memref<32x128xf32, #tpu.memory_space<vmem>>, %arg3: memref<1x128xf32, #tpu.memory_space<vmem>>, %arg4: memref<128x128xf32, #tpu.memory_space<vmem>>, %arg5: memref<1x128xf32, #tpu.memory_space<vmem>>, %arg6: memref<8x128xf32, #tpu.memory_space<vmem>>, %arg7: memref<1x8x128xf32, #tpu.memory_space<vmem>>) attributes {dimension_semantics = [#tpu.dimension_semantics<parallel>], iteration_bounds = array<i64: 1>, scalar_prefetch = 0 : i64, scratch_operands = 0 : i64, tpu.core_type = #tpu.core_type<tc>, window_params = [{transform_indices = @transform_0, window_bounds = array<i64: 8, 32>}, {pipeline_mode = #tpu.pipeline_mode<synchronous>, transform_indices = @transform_1, window_bounds = array<i64: 32, 128>}, {pipeline_mode = #tpu.pipeline_mode<synchronous>, transform_indices = @transform_2, window_bounds = array<i64: 1, 128>}, {pipeline_mode = #tpu.pipeline_mode<synchronous>, transform_indices = @transform_3, window_bounds = array<i64: 128, 128>}, {pipeline_mode = #tpu.pipeline_mode<synchronous>, transform_indices = @transform_4, window_bounds = array<i64: 1, 128>}, {transform_indices = @transform_5, window_bounds = array<i64: 8, 128>}, {transform_indices = @transform_6, window_bounds = array<i64: 1, 8, 128>}]} {
    %c0 = arith.constant 0 : index
    %c0_0 = arith.constant 0 : index
    %0 = vector.load %arg1[%c0, %c0_0] : memref<8x32xf32, #tpu.memory_space<vmem>>, vector<8x32xf32>
    %c0_1 = arith.constant 0 : index
    %c0_2 = arith.constant 0 : index
    %1 = vector.load %arg2[%c0_1, %c0_2] : memref<32x128xf32, #tpu.memory_space<vmem>>, vector<32x128xf32>
    %cst = arith.constant dense<0.000000e+00> : vector<8x128xf32>
    %2 = tpu.matmul %0, %1, %cst {dimension_numbers = #tpu.dot_dimension_numbers<[1], [0], [0], [1], [0, 0, 1, 1], [], []>} : vector<8x32xf32>, vector<32x128xf32>, vector<8x128xf32> -> vector<8x128xf32>
    %c0_3 = arith.constant 0 : index
    %c0_4 = arith.constant 0 : index
    %3 = vector.load %arg3[%c0_3, %c0_4] : memref<1x128xf32, #tpu.memory_space<vmem>>, vector<1x128xf32>
    %4 = vector.broadcast %3 : vector<1x128xf32> to vector<8x128xf32>
    %5 = arith.addf %2, %4 : vector<8x128xf32>
    %cst_5 = arith.constant 0.000000e+00 : f32
    %6 = vector.broadcast %cst_5 : f32 to vector<8x128xf32>
    %7 = arith.maximumf %5, %6 : vector<8x128xf32>
    %c0_6 = arith.constant 0 : index
    %c0_7 = arith.constant 0 : index
    %8 = vector.load %arg4[%c0_6, %c0_7] : memref<128x128xf32, #tpu.memory_space<vmem>>, vector<128x128xf32>
    %cst_8 = arith.constant dense<0.000000e+00> : vector<8x128xf32>
    %9 = tpu.matmul %7, %8, %cst_8 {dimension_numbers = #tpu.dot_dimension_numbers<[1], [0], [0], [1], [0, 0, 1, 1], [], []>} : vector<8x128xf32>, vector<128x128xf32>, vector<8x128xf32> -> vector<8x128xf32>
    %c0_9 = arith.constant 0 : index
    %c0_10 = arith.constant 0 : index
    %10 = vector.load %arg5[%c0_9, %c0_10] : memref<1x128xf32, #tpu.memory_space<vmem>>, vector<1x128xf32>
    %11 = vector.broadcast %10 : vector<1x128xf32> to vector<8x128xf32>
    %12 = arith.addf %9, %11 : vector<8x128xf32>
    %c0_11 = arith.constant 0 : index
    %c0_12 = arith.constant 0 : index
    %13 = vector.load %arg6[%c0_11, %c0_12] : memref<8x128xf32, #tpu.memory_space<vmem>>, vector<8x128xf32>
    tpu.vector_store %arg6[%c0_11, %c0_12], %12 {strides = array<i32>} : memref<8x128xf32, #tpu.memory_space<vmem>>, vector<8x128xf32>,
    %cst_13 = arith.constant dense<0.000000e+00> : vector<128xf32>
    %14 = vector.multi_reduction <add>, %12, %cst_13 [0] : vector<8x128xf32> to vector<128xf32>
    %15 = vector.shape_cast %14 : vector<128xf32> to vector<1x128xf32>
    %16 = vector.shape_cast %15 : vector<1x128xf32> to vector<1x128xf32>
    %17 = vector.broadcast %16 : vector<1x128xf32> to vector<8x128xf32>
    %c0_14 = arith.constant 0 : index
    %c0_15 = arith.constant 0 : index
    %c0_16 = arith.constant 0 : index
    %18 = vector.load %arg7[%c0_14, %c0_15, %c0_16] : memref<1x8x128xf32, #tpu.memory_space<vmem>>, vector<1x8x128xf32>
    %19 = vector.shape_cast %18 : vector<1x8x128xf32> to vector<8x128xf32>
    %20 = vector.shape_cast %17 : vector<8x128xf32> to vector<1x8x128xf32>
    tpu.vector_store %arg7[%c0_14, %c0_15, %c0_16], %20 {strides = array<i32>} : memref<1x8x128xf32, #tpu.memory_space<vmem>>, vector<1x8x128xf32>,
    return
  }
  func.func @transform_0(%arg0: i32) -> (i32, i32) {
    %c0_i32 = arith.constant 0 : i32
    %c0_i32_0 = arith.constant 0 : i32
    return %arg0, %c0_i32 : i32, i32
  }
  func.func @transform_1(%arg0: i32) -> (i32, i32) {
    %c0_i32 = arith.constant 0 : i32
    %c0_i32_0 = arith.constant 0 : i32
    %c0_i32_1 = arith.constant 0 : i32
    return %c0_i32, %c0_i32_0 : i32, i32
  }
  func.func @transform_2(%arg0: i32) -> (i32, i32) {
    %c0_i32 = arith.constant 0 : i32
    %c0_i32_0 = arith.constant 0 : i32
    %c0_i32_1 = arith.constant 0 : i32
    return %c0_i32, %c0_i32_0 : i32, i32
  }
  func.func @transform_3(%arg0: i32) -> (i32, i32) {
    %c0_i32 = arith.constant 0 : i32
    %c0_i32_0 = arith.constant 0 : i32
    %c0_i32_1 = arith.constant 0 : i32
    return %c0_i32, %c0_i32_0 : i32, i32
  }
  func.func @transform_4(%arg0: i32) -> (i32, i32) {
    %c0_i32 = arith.constant 0 : i32
    %c0_i32_0 = arith.constant 0 : i32
    %c0_i32_1 = arith.constant 0 : i32
    return %c0_i32, %c0_i32_0 : i32, i32
  }
  func.func @transform_5(%arg0: i32) -> (i32, i32) {
    %c0_i32 = arith.constant 0 : i32
    %c0_i32_0 = arith.constant 0 : i32
    return %arg0, %c0_i32 : i32, i32
  }
  func.func @transform_6(%arg0: i32) -> (i32, i32, i32) {
    %c0_i32 = arith.constant 0 : i32
    %c0_i32_0 = arith.constant 0 : i32
    %c0_i32_1 = arith.constant 0 : i32
    return %arg0, %c0_i32, %c0_i32_0 : i32, i32, i32
  }
}

</mosaic_0001>

<llo_original>
// kernel: tpu_custom_call.1
$region0: #{tpu_custom_call.1}
  #allocation0 [shape = 'u32[]', space=smem, size = 0x4, offset = 0x4, fixed_abs, tag = 'smem constant byte address 0x4 - core index']
  #allocation1 [shape = 'u32[144,128]{1,0:T(1,128)}', space=vmem, size = 0x12000, scoped, tag = 'internal scratch']
  %s0 = inlined_call_operand.hbm [shape: f32[8,32], index: 0, kind: input, shape index: {}]
  %s1 = inlined_call_operand.hbm [shape: f32[32,128], index: 1, kind: input, shape index: {}]
  %s2 = inlined_call_operand.vmem [shape: f32[1,128], index: 2, kind: input, shape index: {}]
  %s3 = inlined_call_operand.hbm [shape: f32[128,128], index: 3, kind: input, shape index: {}]
  %s4 = inlined_call_operand.vmem [shape: f32[1,128], index: 4, kind: input, shape index: {}]
  %s5 = inlined_call_operand.hbm [shape: f32[8,128], index: 5, kind: output, shape index: {0}]
  %s6 = inlined_call_operand.hbm [shape: f32[1,8,128], index: 6, kind: output, shape index: {1}]
  %7 = xla_tuple %s5, %s6
  %s8 = sld [smem:[#allocation0]]
  $region50: #{tpu_custom_call.1} parent=0
    _
  %s10 = ssub.s32 1, %s8
  %s11 = scalar_select 0, %s10, %s8
  $region1: #{tpu_custom_call.1} parent=0
    #allocation2 [shape = 'u8[4096]{0}', space=vmem, size = 0x1000, scoped, tag = 'input window, operand 0, single buffered']
    #allocation3 [shape = 's32[1]{0}', space=sflag, size = 0x4, scoped, tag = 'scoped memory for tpu_custom_call.1']
    #allocation4 [shape = 's32[1]{0}', space=sflag, size = 0x4, scoped, tag = 'scoped memory for tpu_custom_call.1']
    #allocation5 [shape = 'u8[16384]{0}', space=vmem, size = 0x4000, scoped, tag = 'input window, operand 1, single buffered']
    #allocation6 [shape = 's32[1]{0}', space=sflag, size = 0x4, scoped, tag = 'scoped memory for tpu_custom_call.1']
    #allocation7 [shape = 'u8[65536]{0}', space=vmem, size = 0x10000, scoped, tag = 'input window, operand 3, single buffered']
    #allocation8 [shape = 'u8[4096]{0}', space=vmem, size = 0x1000, scoped, tag = 'output window, operand 0, single buffered']
    #allocation9 [shape = 'u8[4096]{0}', space=vmem, size = 0x1000, scoped, tag = 'output window, operand 1, single buffered']
    #allocation10 [shape = 's32[1]{0}', space=sflag, size = 0x4, scoped, tag = 'scoped memory for tpu_custom_call.1']
    %12 = vsyncpa [#allocation3], 0
    %13 = vsyncpa [#allocation6], 0
    %14 = vsyncpa [#allocation4], 0
    %15 = vsyncpa [#allocation10], 0
    // Predicated region
    $region2: #{tpu_custom_call.1} parent=1 // pred_check
      _
    $region3: #{tpu_custom_call.1} parent=1 // pred_check_branch
      %17 = sbr.rel (0) target = $region5
    $region4: #{tpu_custom_call.1} parent=1 // pred_region
      %s19 = ssub.s32 128, 128
      %20 = vsyncadd [#allocation3], %s19
      %s22 = sshll.u32 [#allocation2], 4
      %s23 = int_to_ptr.vmem [resolvable:$true] %s22
      %25 = dma.hbm_to_vmem [thread:$0]  %s0, 128, %s23, [#allocation3]
    $region5: #{tpu_custom_call.1} parent=1 // pred_fallthru
      _
    // Predicated region
    $region6: #{tpu_custom_call.1} parent=1 // pred_check
      _
    $region7: #{tpu_custom_call.1} parent=1 // pred_check_branch
      %27 = sbr.rel (0) target = $region9
    $region8: #{tpu_custom_call.1} parent=1 // pred_region
      %s29 = ssub.s32 512, 512
      %30 = vsyncadd [#allocation6], %s29
      %s31 = sshll.u32 [#allocation5], 4
      %s32 = int_to_ptr.vmem [resolvable:$true] %s31
      %37 = dma.hbm_to_vmem [thread:$0]  %s1, 512, %s32, [#allocation6], 128, 128, 8
    $region9: #{tpu_custom_call.1} parent=1 // pred_fallthru
      _
    // Predicated region
    $region10: #{tpu_custom_call.1} parent=1 // pred_check
      _
    $region11: #{tpu_custom_call.1} parent=1 // pred_check_branch
      %39 = sbr.rel (0) target = $region13
    $region12: #{tpu_custom_call.1} parent=1 // pred_region
      _
    $region13: #{tpu_custom_call.1} parent=1 // pred_fallthru
      _
    // Predicated region
    $region14: #{tpu_custom_call.1} parent=1 // pred_check
      _
    $region15: #{tpu_custom_call.1} parent=1 // pred_check_branch
      %41 = sbr.rel (0) target = $region17
    $region16: #{tpu_custom_call.1} parent=1 // pred_region
      %s43 = ssub.s32 2048, 2048
      %44 = vsyncadd [#allocation6], %s43
      %s45 = sshll.u32 [#allocation7], 4
      %s46 = int_to_ptr.vmem [resolvable:$true] %s45
      %51 = dma.hbm_to_vmem [thread:$0]  %s3, 2048, %s46, [#allocation6], 128, 128, 8
    $region17: #{tpu_custom_call.1} parent=1 // pred_fallthru
      _
    // Predicated region
    $region18: #{tpu_custom_call.1} parent=1 // pred_check
      _
    $region19: #{tpu_custom_call.1} parent=1 // pred_check_branch
      %53 = sbr.rel (0) target = $region21
    $region20: #{tpu_custom_call.1} parent=1 // pred_region
      _
    $region21: #{tpu_custom_call.1} parent=1 // pred_fallthru
      _
    // Predicated region
    $region22: #{tpu_custom_call.1} parent=1 // pred_check
      _
    $region23: #{tpu_custom_call.1} parent=1 // pred_check_branch
      %55 = sbr.rel (0) target = $region25
    $region24: #{tpu_custom_call.1} parent=1 // pred_region
      %56 = dma.done [#allocation3], 128
    $region25: #{tpu_custom_call.1} parent=1 // pred_fallthru
      _
    // Predicated region
    $region26: #{tpu_custom_call.1} parent=1 // pred_check
      _
    $region27: #{tpu_custom_call.1} parent=1 // pred_check_branch
      %58 = sbr.rel (0) target = $region29
    $region28: #{tpu_custom_call.1} parent=1 // pred_region
      %59 = dma.done [#allocation6], 512
    $region29: #{tpu_custom_call.1} parent=1 // pred_fallthru
      _
    // Predicated region
    $region30: #{tpu_custom_call.1} parent=1 // pred_check
      _
    $region31: #{tpu_custom_call.1} parent=1 // pred_check_branch
      %61 = sbr.rel (0) target = $region33
    $region32: #{tpu_custom_call.1} parent=1 // pred_region
      %62 = dma.done [#allocation6], 2048
    $region33: #{tpu_custom_call.1} parent=1 // pred_fallthru
      _
    %v63 = vld [vmem:[#allocation2] sm:$0xff]
    %v64 = vld [vmem:[#allocation5] sm:$0xff]
    %v65 = vld [vmem:[#allocation5 + $0x8] sm:$0xff]
    %v66 = vld [vmem:[#allocation5 + $0x10] sm:$0xff]
    %v67 = vld [vmem:[#allocation5 + $0x18] sm:$0xff]
    %v68 = vld [vmem:[%s2] sm:$0x1]
    %v70 = vlaneseq
    %v71 = vshrl.u32 %v70, 7
    %v72 = vsub.s32 0, %v71
    %v73 = vrot.slane %v68, %v72
    %vm75 = vcmask 261120
    %v77 = vsel %vm75, %v63, 0
    %79 = vmatprep.subr.mxu0 0.0
    %80 = vmatpush1.msra.mxu0 %v64
    %81 = vmatprep.subr.mxu0 0.0
    %82 = vmatpush1.msra.mxu0 %v65
    %83 = vmatprep.subr.mxu0 0.0
    %84 = vmatpush1.msra.mxu0 %v66
    %85 = vmatprep.subr.mxu0 0.0
    %86 = vmatpush1.msra.mxu0 %v67
    %87 = vmatprep.subr.mxu0 0.0
    %88 = vmatpush1.msra.mxu0 0.0
    %89 = vmatprep.subr.mxu0 0.0
    %90 = vmatpush1.msra.mxu0 0.0
    %91 = vmatprep.subr.mxu0 0.0
    %92 = vmatpush1.msra.mxu0 0.0
    %93 = vmatprep.subr.mxu0 0.0
    %94 = vmatpush1.msra.mxu0 0.0
    %95 = vmatprep.subr.mxu0 0.0
    %96 = vmatpush1.msra.mxu0 0.0
    %97 = vmatprep.subr.mxu0 0.0
    %98 = vmatpush1.msra.mxu0 0.0
    %99 = vmatprep.subr.mxu0 0.0
    %100 = vmatpush1.msra.mxu0 0.0
    %101 = vmatprep.subr.mxu0 0.0
    %102 = vmatpush1.msra.mxu0 0.0
    %103 = vmatprep.subr.mxu0 0.0
    %104 = vmatpush1.msra.mxu0 0.0
    %105 = vmatprep.subr.mxu0 0.0
    %106 = vmatpush1.msra.mxu0 0.0
    %107 = vmatprep.subr.mxu0 0.0
    %108 = vmatpush1.msra.mxu0 0.0
    %109 = vmatprep.subr.mxu0 0.0
    %110 = vmatpush1.msra.mxu0 0.0
    %111 = vmatprep.subr.mxu0 0.0
    %112 = vmatpush1.msra.mxu0 0.0
    %113 = vmatprep.subr.mxu0 0.0
    %114 = vmatpush1.msra.mxu0 0.0
    %115 = vmatprep.subr.mxu0 0.0
    %116 = vmatpush1.msra.mxu0 0.0
    %117 = vmatprep.subr.mxu0 0.0
    %118 = vmatpush1.msra.mxu0 0.0
    %119 = vmatprep.subr.mxu0 0.0
    %120 = vmatpush1.msra.mxu0 0.0
    %121 = vmatprep.subr.mxu0 0.0
    %122 = vmatpush1.msra.mxu0 0.0
    %123 = vmatprep.subr.mxu0 0.0
    %124 = vmatpush1.msra.mxu0 0.0
    %125 = vmatprep.subr.mxu0 0.0
    %126 = vmatpush1.msra.mxu0 0.0
    %127 = vmatprep.subr.mxu0 0.0
    %128 = vmatpush1.msra.mxu0 0.0
    %129 = vmatprep.subr.mxu0 0.0
    %130 = vmatpush1.msra.mxu0 0.0
    %131 = vmatprep.subr.mxu0 0.0
    %132 = vmatpush1.msra.mxu0 0.0
    %133 = vmatprep.subr.mxu0 0.0
    %134 = vmatpush1.msra.mxu0 0.0
    %135 = vmatprep.subr.mxu0 0.0
    %136 = vmatpush1.msra.mxu0 0.0
    %137 = vmatprep.subr.mxu0 0.0
    %138 = vmatpush1.msra.mxu0 0.0
    %139 = vmatprep.subr.mxu0 0.0
    %140 = vmatpush1.msra.mxu0 0.0
    %141 = vmatprep.subr.mxu0 0.0
    %142 = vmatpush1.msra.mxu0 0.0
    %143 = vmatprep.mubr.f32.mxu0 0.0
    %144 = vmatmul.mubr.f32.gmra.mrb[0].mxu0 %v77
    %v145 = vpop.f32.mrb[0].mxu0
    %v146 = vadd.f32 %v73, %v145
    %v147 = vpop.f32.mrb[0].mxu0
    %148 = vdwg.mxu0
    %v149 = vmax.f32 %v146, 0.0
    %v150 = vld [vmem:[#allocation7] sm:$0xff]
    %v151 = vld [vmem:[#allocation7 + $0x8] sm:$0xff]
    %v152 = vld [vmem:[#allocation7 + $0x10] sm:$0xff]
    %v153 = vld [vmem:[#allocation7 + $0x18] sm:$0xff]
    %v154 = vld [vmem:[#allocation7 + $0x20] sm:$0xff]
    %v155 = vld [vmem:[#allocation7 + $0x28] sm:$0xff]
    %v156 = vld [vmem:[#allocation7 + $0x30] sm:$0xff]
    %v157 = vld [vmem:[#allocation7 + $0x38] sm:$0xff]
    %v158 = vld [vmem:[#allocation7 + $0x40] sm:$0xff]
    %v159 = vld [vmem:[#allocation7 + $0x48] sm:$0xff]
    %v160 = vld [vmem:[#allocation7 + $0x50] sm:$0xff]
    %v161 = vld [vmem:[#allocation7 + $0x58] sm:$0xff]
    %v162 = vld [vmem:[#allocation7 + $0x60] sm:$0xff]
    %v163 = vld [vmem:[#allocation7 + $0x68] sm:$0xff]
    %v164 = vld [vmem:[#allocation7 + $0x70] sm:$0xff]
    %v165 = vld [vmem:[#allocation7 + $0x78] sm:$0xff]
    %v166 = vld [vmem:[%s4] sm:$0x1]
    %v168 = vlaneseq
    %v169 = vshrl.u32 %v168, 7
    %v170 = vsub.s32 0, %v169
    %v171 = vrot.slane %v166, %v170
    %173 = vmatprep.subr.mxu0 0.0
    %174 = vmatpush1.msra.mxu0 %v150
    %175 = vmatprep.subr.mxu0 0.0
    %176 = vmatpush1.msra.mxu0 %v151
    %177 = vmatprep.subr.mxu0 0.0
    %178 = vmatpush1.msra.mxu0 %v152
    %179 = vmatprep.subr.mxu0 0.0
    %180 = vmatpush1.msra.mxu0 %v153
    %181 = vmatprep.subr.mxu0 0.0
    %182 = vmatpush1.msra.mxu0 %v154
    %183 = vmatprep.subr.mxu0 0.0
    %184 = vmatpush1.msra.mxu0 %v155
    %185 = vmatprep.subr.mxu0 0.0
    %186 = vmatpush1.msra.mxu0 %v156
    %187 = vmatprep.subr.mxu0 0.0
    %188 = vmatpush1.msra.mxu0 %v157
    %189 = vmatprep.subr.mxu0 0.0
    %190 = vmatpush1.msra.mxu0 %v158
    %191 = vmatprep.subr.mxu0 0.0
    %192 = vmatpush1.msra.mxu0 %v159
    %193 = vmatprep.subr.mxu0 0.0
    %194 = vmatpush1.msra.mxu0 %v160
    %195 = vmatprep.subr.mxu0 0.0
    %196 = vmatpush1.msra.mxu0 %v161
    %197 = vmatprep.subr.mxu0 0.0
    %198 = vmatpush1.msra.mxu0 %v162
    %199 = vmatprep.subr.mxu0 0.0
    %200 = vmatpush1.msra.mxu0 %v163
    %201 = vmatprep.subr.mxu0 0.0
    %202 = vmatpush1.msra.mxu0 %v164
    %203 = vmatprep.subr.mxu0 0.0
    %204 = vmatpush1.msra.mxu0 %v165
    %205 = vmatprep.subr.mxu0 0.0
    %206 = vmatpush1.msra.mxu0 0.0
    %207 = vmatprep.subr.mxu0 0.0
    %208 = vmatpush1.msra.mxu0 0.0
    %209 = vmatprep.subr.mxu0 0.0
    %210 = vmatpush1.msra.mxu0 0.0
    %211 = vmatprep.subr.mxu0 0.0
    %212 = vmatpush1.msra.mxu0 0.0
    %213 = vmatprep.subr.mxu0 0.0
    %214 = vmatpush1.msra.mxu0 0.0
    %215 = vmatprep.subr.mxu0 0.0
    %216 = vmatpush1.msra.mxu0 0.0
    %217 = vmatprep.subr.mxu0 0.0
    %218 = vmatpush1.msra.mxu0 0.0
    %219 = vmatprep.subr.mxu0 0.0
    %220 = vmatpush1.msra.mxu0 0.0
    %221 = vmatprep.subr.mxu0 0.0
    %222 = vmatpush1.msra.mxu0 0.0
    %223 = vmatprep.subr.mxu0 0.0
    %224 = vmatpush1.msra.mxu0 0.0
    %225 = vmatprep.subr.mxu0 0.0
    %226 = vmatpush1.msra.mxu0 0.0
    %227 = vmatprep.subr.mxu0 0.0
    %228 = vmatpush1.msra.mxu0 0.0
    %229 = vmatprep.subr.mxu0 0.0
    %230 = vmatpush1.msra.mxu0 0.0
    %231 = vmatprep.subr.mxu0 0.0
    %232 = vmatpush1.msra.mxu0 0.0
    %233 = vmatprep.subr.mxu0 0.0
    %234 = vmatpush1.msra.mxu0 0.0
    %235 = vmatprep.subr.mxu0 0.0
    %236 = vmatpush1.msra.mxu0 0.0
    %237 = vmatprep.mubr.f32.mxu0 0.0
    %238 = vmatmul.mubr.f32.gmra.mrb[0].mxu0 %v149
    %v239 = vpop.f32.mrb[0].mxu0
    %v240 = vadd.f32 %v171, %v239
    %v241 = vpop.f32.mrb[0].mxu0
    %242 = vdwg.mxu0
    %243 = vst [vmem:[#allocation8] sm:$0xff] %v240
    %v244 = vrot.slane %v240, 4
    %v245 = vadd.f32 %v240, %v244
    %v246 = vrot.slane %v245, 2
    %v247 = vadd.f32 %v245, %v246
    %v248 = vrot.slane %v247, 1
    %v249 = vadd.f32 %v247, %v248
    %250 = vst [vmem:[#allocation9] sm:$0xff] %v249
    // Predicated region
    $region34: #{tpu_custom_call.1} parent=1 // pred_check
      _
    $region35: #{tpu_custom_call.1} parent=1 // pred_check_branch
      %252 = sbr.rel (0) target = $region37
    $region36: #{tpu_custom_call.1} parent=1 // pred_region
      %s254 = ssub.s32 128, 128
      %255 = vsyncadd [#allocation4], %s254
      %s257 = sshll.u32 [#allocation8], 4
      %s258 = int_to_ptr.vmem [resolvable:$true] %s257
      %260 = dma.vmem_to_hbm [thread:$0]  %s258, 128, %s5, [#allocation4]
    $region37: #{tpu_custom_call.1} parent=1 // pred_fallthru
      _
    // Predicated region
    $region38: #{tpu_custom_call.1} parent=1 // pred_check
      _
    $region39: #{tpu_custom_call.1} parent=1 // pred_check_branch
      %262 = sbr.rel (0) target = $region41
    $region40: #{tpu_custom_call.1} parent=1 // pred_region
      %s264 = ssub.s32 128, 128
      %265 = vsyncadd [#allocation10], %s264
      %s267 = sshll.u32 [#allocation9], 4
      %s268 = int_to_ptr.vmem [resolvable:$true] %s267
      %270 = dma.vmem_to_hbm [thread:$0]  %s268, 128, %s6, [#allocation10]
    $region41: #{tpu_custom_call.1} parent=1 // pred_fallthru
      _
    // Predicated region
    $region42: #{tpu_custom_call.1} parent=1 // pred_check
      _
    $region43: #{tpu_custom_call.1} parent=1 // pred_check_branch
      %272 = sbr.rel (0) target = $region45
    $region44: #{tpu_custom_call.1} parent=1 // pred_region
      %273 = dma.done [#allocation4], 128
    $region45: #{tpu_custom_call.1} parent=1 // pred_fallthru
      _
    // Predicated region
    $region46: #{tpu_custom_call.1} parent=1 // pred_check
      _
    $region47: #{tpu_custom_call.1} parent=1 // pred_check_branch
      %275 = sbr.rel (0) target = $region49
    $region48: #{tpu_custom_call.1} parent=1 // pred_region
      %276 = dma.done [#allocation10], 128
    $region49: #{tpu_custom_call.1} parent=1 // pred_fallthru
      _
    %277 = vsyncpa [#allocation3], 1
    %278 = vsyncpa [#allocation6], 1
    %279 = vsyncpa [#allocation4], 1
    %280 = vsyncpa [#allocation10], 1

</llo_original>
